<compile_context>
chip_gen: v7x
topology: tpu7x:2x2x1
jax: 0.10.0
libtpu: 0.0.40
codegen_flags: <defaults>
</compile_context>

<pallas_src>
import functools

import jax
import jax.numpy as jnp
from jax import lax
from jax.experimental import pallas as pl
from jax.experimental.pallas import tpu as pltpu


def _recip(x):
    """Approx EUP reciprocal + one Newton step (~f32-accurate), instead of the
    multi-op VALU exact-divide sequence."""
    r = pl.reciprocal(x, approx=True)
    return r * (2.0 - x * r)


def _ipow(x, n):
    """x**n for a static integer n >= 1 via square-and-multiply."""
    result = None
    p = x
    while n:
        if n & 1:
            result = p if result is None else result * p
        n >>= 1
        if n:
            p = p * p
    return result


def _rq_kernel(x1_ref, x2_ref, sn1_ref, sn2_ref, o_ref, *, neg2scale, sv2, alpha):
    # Scale the x1 tile once (O(tm*D)) so the per-element epilogue is only
    # two adds + a max + the alpha-specialized power path.
    x1s = x1_ref[...] * neg2scale                               # (TM, D)
    dot = lax.dot_general(                                      # (TM, TN) on MXU
        x1s, x2_ref[...],
        dimension_numbers=(((1,), (1,)), ((), ())),
        preferred_element_type=jnp.float32)

    # base = 1 + 0.5*sqdist/(alpha*ls^2), with the +1 and *scale folded into
    # the precomputed row norms: sn1 = 1 + scale*|x1|^2, sn2 = scale*|x2|^2.
    # Clamp at 1.0 (== clamping sqdist at 0) to guard f32 cancellation.
    base = jnp.maximum(sn1_ref[...] + sn2_ref[...] + dot, 1.0)  # (TM, TN)

    if alpha == 1.0:
        # Single approx reciprocal (EUP) + Newton step.
        out = sv2 * _recip(base)
    elif float(alpha).is_integer() and 1.0 < alpha <= 8.0:
        # Small integer exponent: square-and-multiply, then one reciprocal.
        out = sv2 * _recip(_ipow(base, int(alpha)))
    elif float(2.0 * alpha).is_integer() and 0.0 < alpha <= 8.5:
        # Half-integer alpha: base^-(k+0.5) = rsqrt(base) * base^-k.
        k = int(alpha - 0.5)
        r = lax.rsqrt(base)
        if k >= 1:
            r = r * _recip(_ipow(base, k))
        out = sv2 * r
    else:
        # Generic alpha: exp(-alpha * log(base)) — 2 EUP transcendentals.
        out = sv2 * jnp.exp((-alpha) * jnp.log(base))

    o_ref[...] = out.astype(o_ref.dtype)


def _round_up(x, m):
    return ((x + m - 1) // m) * m


def _pick_tile(n, max_tile, align):
    """Pick a tile size (multiple of `align`, <= ~max_tile) that minimizes the
    tail padding round_up(n, tile) - n; prefer the larger tile on ties."""
    n_al = _round_up(max(n, 1), align)
    cap = _round_up(min(max_tile, n_al), align)
    cands = sorted({cap,
                    _round_up(max((cap * 3) // 4, align), align),
                    _round_up(max(cap // 2, align), align),
                    _round_up(max(cap // 4, align), align),
                    align}, reverse=True)
    best_t, best_pad = cands[0], _round_up(n, cands[0]) - n
    for t in cands[1:]:
        pad = _round_up(n, t) - n
        if pad < best_pad:
            best_t, best_pad = t, pad
    return best_t


def rational_quadratic_kernel(x1, x2, length_scale=1.0, signal_variance=1.0,
                              alpha=1.0, *, tm=512, tn=512,
                              out_dtype=jnp.float32):
    """Pallas implementation of RationalQuadraticKernel.forward(x1, x2)."""
    x1 = jnp.asarray(x1, jnp.float32)
    x2 = jnp.asarray(x2, jnp.float32)
    n1, d = x1.shape
    n2, d2 = x2.shape
    assert d == d2, "feature dims must match"

    # Module hyper-parameters are static scalars -> bake into the kernel.
    length_scale = float(length_scale)
    signal_variance = float(signal_variance)
    alpha = float(alpha)
    scale = 0.5 / (alpha * length_scale * length_scale)
    sv2 = signal_variance * signal_variance

    # Tile selection: (8,128)-aligned, minimal tail padding.
    tm_eff = _pick_tile(n1, tm, 8)
    tn_eff = _pick_tile(n2, tn, 128)
    n1_pad = _round_up(n1, tm_eff)
    n2_pad = _round_up(n2, tn_eff)

    # v7x has 2 TensorCores: expose >= 2 parallel grid blocks for small
    # problems when the split stays (8,128)-aligned.
    if (n1_pad // tm_eff) * (n2_pad // tn_eff) == 1:
        if n1_pad >= 16 and (n1_pad // 2) % 8 == 0:
            tm_eff = n1_pad // 2
        elif n2_pad >= 256 and (n2_pad // 2) % 128 == 0:
            tn_eff = n2_pad // 2

    if n1_pad != n1:
        x1 = jnp.pad(x1, ((0, n1_pad - n1), (0, 0)))
    if n2_pad != n2:
        x2 = jnp.pad(x2, ((0, n2_pad - n2), (0, 0)))

    # Row norms precomputed once (O(N*D)) with constants folded in, instead of
    # per-grid-step recompute + in-kernel transpose.  Padded rows -> base == 1.
    sn1 = 1.0 + scale * jnp.sum(x1 * x1, axis=1, keepdims=True)     # (N1p, 1)
    sn2 = (scale * jnp.sum(x2 * x2, axis=1)).reshape(1, n2_pad)     # (1, N2p)

    kernel = functools.partial(_rq_kernel, neg2scale=-2.0 * scale,
                               sv2=sv2, alpha=alpha)

    # VMEM budget: double-buffered tiles + headroom; cap at v7x physical
    # (64 MiB).  v5e/v6e have 128 MiB physical — raise the cap there if a
    # very large D demands it.
    out_bytes = jnp.dtype(out_dtype).itemsize
    est = 2 * (tm_eff * d * 4 + tn_eff * d * 4 + tm_eff * 4 + tn_eff * 4
               + tm_eff * tn_eff * out_bytes)
    vmem_limit = int(min(max(2 * est + (4 << 20), 16 << 20), 64 << 20))

    out = pl.pallas_call(
        kernel,
        out_shape=jax.ShapeDtypeStruct((n1_pad, n2_pad), out_dtype),
        grid_spec=pl.GridSpec(
            grid=(n1_pad // tm_eff, n2_pad // tn_eff),
            in_specs=[
                pl.BlockSpec((tm_eff, d), lambda i, j: (i, 0)),    # x1 rows
                pl.BlockSpec((tn_eff, d), lambda i, j: (j, 0)),    # x2 rows
                pl.BlockSpec((tm_eff, 1), lambda i, j: (i, 0)),    # sn1 col
                pl.BlockSpec((1, tn_eff), lambda i, j: (0, j)),    # sn2 row
            ],
            out_specs=pl.BlockSpec((tm_eff, tn_eff), lambda i, j: (i, j)),
        ),
        compiler_params=pltpu.CompilerParams(
            dimension_semantics=("parallel", "parallel"),
            vmem_limit_bytes=vmem_limit),
    )(x1, x2, sn1, sn2)

    if (n1_pad, n2_pad) != (n1, n2):
        out = out[:n1, :n2]
    return out


def _reference(x1, x2, length_scale, signal_variance, alpha):
    sqdist = (jnp.sum(x1 ** 2, 1).reshape(-1, 1)
              + jnp.sum(x2 ** 2, 1)
              - 2.0 * x1 @ x2.T)
    return (signal_variance ** 2) * jnp.power(
        1.0 + 0.5 * sqdist / alpha / (length_scale ** 2), -alpha)


if __name__ == "__main__":
    key = jax.random.PRNGKey(0)
    k1, k2 = jax.random.split(key)

    N1, N2, D = 256, 128, 32
    x1 = jax.random.normal(k1, (N1, D), dtype=jnp.float32)
    x2 = jax.random.normal(k2, (N2, D), dtype=jnp.float32)

    cases = [
        # (x1, x2, length_scale, signal_variance, alpha)
        (x1, x2, 1.0, 1.0, 1.0),         # module defaults -> approx-recip path
        (x1[:200], x2, 0.7, 1.3, 1.7),   # generic alpha (exp/log), ragged N1
        (x1, x2, 1.2, 0.9, 3.0),         # integer alpha -> square-and-multiply
        (x1, x2, 0.8, 1.1, 2.5),         # half-integer alpha -> rsqrt path
    ]
    for (a, b, ls, sv, al) in cases:
        out = jax.block_until_ready(rational_quadratic_kernel(a, b, ls, sv, al))
        ref = _reference(a, b, ls, sv, al)
        assert out.shape == ref.shape, f"shape mismatch (alpha={al})"
        assert jnp.allclose(out, ref, atol=1e-4, rtol=1e-4), f"mismatch (alpha={al})"

    print("KERNEL_OK")
</pallas_src>

<mosaic_0001>
module attributes {stable_mosaic.version = 11 : i64} {
  func.func @_rq_kernel(%arg0: i32, %arg1: i32, %arg2: memref<128x32xf32, #tpu.memory_space<vmem>>, %arg3: memref<128x32xf32, #tpu.memory_space<vmem>>, %arg4: memref<128x1xf32, #tpu.memory_space<vmem>>, %arg5: memref<1x128xf32, #tpu.memory_space<vmem>>, %arg6: memref<128x128xf32, #tpu.memory_space<vmem>>) attributes {dimension_semantics = [#tpu.dimension_semantics<parallel>, #tpu.dimension_semantics<parallel>], iteration_bounds = array<i64: 2, 1>, scalar_prefetch = 0 : i64, scratch_operands = 0 : i64, tpu.core_type = #tpu.core_type<tc>, window_params = [{transform_indices = @transform_0, window_bounds = array<i64: 128, 32>}, {transform_indices = @transform_1, window_bounds = array<i64: 128, 32>}, {transform_indices = @transform_2, window_bounds = array<i64: 128, 1>}, {transform_indices = @transform_3, window_bounds = array<i64: 1, 128>}, {transform_indices = @transform_4, window_bounds = array<i64: 128, 128>}]} {
    %c0 = arith.constant 0 : index
    %c0_0 = arith.constant 0 : index
    %0 = vector.load %arg2[%c0, %c0_0] : memref<128x32xf32, #tpu.memory_space<vmem>>, vector<128x32xf32>
    %cst = arith.constant -1.000000e+00 : f32
    %1 = vector.broadcast %cst : f32 to vector<128x32xf32>
    %2 = arith.mulf %0, %1 : vector<128x32xf32>
    %c0_1 = arith.constant 0 : index
    %c0_2 = arith.constant 0 : index
    %3 = vector.load %arg3[%c0_1, %c0_2] : memref<128x32xf32, #tpu.memory_space<vmem>>, vector<128x32xf32>
    %cst_3 = arith.constant dense<0.000000e+00> : vector<128x128xf32>
    %4 = tpu.matmul %2, %3, %cst_3 {dimension_numbers = #tpu.dot_dimension_numbers<[1], [1], [0], [0], [0, 0, 1, 0], [], []>} : vector<128x32xf32>, vector<128x32xf32>, vector<128x128xf32> -> vector<128x128xf32>
    %c0_4 = arith.constant 0 : index
    %c0_5 = arith.constant 0 : index
    %5 = vector.load %arg4[%c0_4, %c0_5] : memref<128x1xf32, #tpu.memory_space<vmem>>, vector<128x1xf32>
    %c0_6 = arith.constant 0 : index
    %c0_7 = arith.constant 0 : index
    %6 = vector.load %arg5[%c0_6, %c0_7] : memref<1x128xf32, #tpu.memory_space<vmem>>, vector<1x128xf32>
    %7 = vector.broadcast %5 : vector<128x1xf32> to vector<128x128xf32>
    %8 = vector.broadcast %6 : vector<1x128xf32> to vector<128x128xf32>
    %9 = arith.addf %7, %8 : vector<128x128xf32>
    %10 = arith.addf %9, %4 : vector<128x128xf32>
    %cst_8 = arith.constant 1.000000e+00 : f32
    %11 = vector.broadcast %cst_8 : f32 to vector<128x128xf32>
    %12 = arith.maximumf %10, %11 : vector<128x128xf32>
    %13 = tpu.reciprocal %12 {approx = true} : vector<128x128xf32> -> vector<128x128xf32>
    %14 = arith.mulf %12, %13 : vector<128x128xf32>
    %cst_9 = arith.constant 2.000000e+00 : f32
    %15 = vector.broadcast %cst_9 : f32 to vector<128x128xf32>
    %16 = arith.subf %15, %14 : vector<128x128xf32>
    %17 = arith.mulf %13, %16 : vector<128x128xf32>
    %cst_10 = arith.constant 1.000000e+00 : f32
    %18 = vector.broadcast %cst_10 : f32 to vector<128x128xf32>
    %19 = arith.mulf %18, %17 : vector<128x128xf32>
    %c0_11 = arith.constant 0 : index
    %c0_12 = arith.constant 0 : index
    %20 = vector.load %arg6[%c0_11, %c0_12] : memref<128x128xf32, #tpu.memory_space<vmem>>, vector<128x128xf32>
    tpu.vector_store %arg6[%c0_11, %c0_12], %19 {strides = array<i32>} : memref<128x128xf32, #tpu.memory_space<vmem>>, vector<128x128xf32>,
    return
  }
  func.func @transform_0(%arg0: i32, %arg1: i32) -> (i32, i32) {
    %c0_i32 = arith.constant 0 : i32
    %c0_i32_0 = arith.constant 0 : i32
    return %arg0, %c0_i32 : i32, i32
  }
  func.func @transform_1(%arg0: i32, %arg1: i32) -> (i32, i32) {
    %c0_i32 = arith.constant 0 : i32
    %c0_i32_0 = arith.constant 0 : i32
    return %arg1, %c0_i32 : i32, i32
  }
  func.func @transform_2(%arg0: i32, %arg1: i32) -> (i32, i32) {
    %c0_i32 = arith.constant 0 : i32
    %c0_i32_0 = arith.constant 0 : i32
    return %arg0, %c0_i32 : i32, i32
  }
  func.func @transform_3(%arg0: i32, %arg1: i32) -> (i32, i32) {
    %c0_i32 = arith.constant 0 : i32
    %c0_i32_0 = arith.constant 0 : i32
    return %c0_i32, %arg1 : i32, i32
  }
  func.func @transform_4(%arg0: i32, %arg1: i32) -> (i32, i32) {
    %c0_i32 = arith.constant 0 : i32
    return %arg0, %arg1 : i32, i32
  }
}

</mosaic_0001>

<llo_original>
// kernel: tpu_custom_call.1
$region0: #{tpu_custom_call.1}
  #allocation0 [shape = 'u32[]', space=smem, size = 0x4, offset = 0x4, fixed_abs, tag = 'smem constant byte address 0x4 - core index']
  #allocation1 [shape = 'u32[144,128]{1,0:T(1,128)}', space=vmem, size = 0x12000, scoped, tag = 'internal scratch']
  %s0 = inlined_call_operand.vmem [shape: f32[256,32], index: 0, kind: input, shape index: {}]
  %s1 = inlined_call_operand.vmem [shape: f32[128,32], index: 1, kind: input, shape index: {}]
  %s2 = inlined_call_operand.vmem [shape: f32[256,1], index: 2, kind: input, shape index: {}]
  %s3 = inlined_call_operand.vmem [shape: f32[1,128], index: 3, kind: input, shape index: {}]
  %s4 = inlined_call_operand.hbm [shape: f32[256,128], index: 4, kind: output, shape index: {}]
  %s5 = sld [smem:[#allocation0]]
  $region49: #{tpu_custom_call.1} parent=0
    _
  %s7 = ssub.s32 1, %s5
  %s8 = scalar_select 0, %s7, %s5
  $region1: #{tpu_custom_call.1} parent=0
    #allocation2 [shape = 'u8[131072]{0}', space=vmem, size = 0x20000, scoped, tag = 'output window, operand 0']
    #allocation3 [shape = 's32[2]{0}', space=sflag, size = 0x8, scoped, tag = 'scoped memory for tpu_custom_call.1']
    %9 = vsyncpa [#allocation3], 0
    %s10 = scalar_lea.sflag [#allocation3], 1
    %11 = vsyncpa %s10, 0
    loop: start=0, step=1, limit=4
    $region2: #{tpu_custom_call.1} parent=1 // loop_pre_header
      _
    $region3: #{tpu_custom_call.1} parent=1 // loop_header
      %s13 = sphi 0, %s17
      %p14 = scmp.ge.s32.totalorder %s13, 4
      %s20 = sphi 0, %s32
      %s21 = sphi 0, %s28
      %s22 = sphi 0, %s20
      %s23 = sphi 0, %s21
      %s24 = sphi 0, %s22
      %s25 = sphi 0, %s23
      %s35 = sphi 0, %s37
      %s38 = sphi 0, %s35
      %s39 = sphi 0, %s38
      %s55 = sphi 0, %s39
      %s61 = sphi 0, %s63
      %s64 = sphi 0, %s61
      %s65 = sphi 0, %s64
      %s81 = sphi 0, %s65
      %s87 = sphi 0, %s89
      %s90 = sphi 0, %s87
      %s91 = sphi 0, %s90
      %s107 = sphi 0, %s91
      %s113 = sphi 0, %s115
      %s116 = sphi 0, %s113
      %s117 = sphi 0, %s116
      %s133 = sphi 0, %s117
      %s141 = sphi 0, %s143
      %s144 = sphi 0, %s141
      %s145 = sphi 0, %s144
      %s161 = sphi 0, %s145
    $region4: #{tpu_custom_call.1} parent=1 // loop_header_branch
      %16 = sbr.rel (%p14) target = $region8
    $region5: #{tpu_custom_call.1} parent=1 // loop_body
      %s18 = ssub.s32 %s13, 1
      %s19 = ssub.s32 %s13, 2
      %s26 = sadd.s32 1, %s21
      %p27 = scmp.ge.s32.totalorder %s26, 1
      %s28 = scalar_select %p27, 0, %s26
      %s29 = sadd.s32 1, %s20
      %s30 = scalar_select %p27, %s29, %s20
      %p31 = scmp.ge.s32.totalorder %s30, 2
      %s32 = scalar_select %p31, 0, %s30
      %s33 = ssub.s32 %s20, %s32
      %p34 = scmp.eq.s32.totalorder %s33, 0
      %s36 = sadd.s32 %s35, 1
      %s37 = scalar_select %p34, %s35, %s36
      %p40 = pneg %p34
      %p41 = scmp.eq.s32.totalorder %s13, 1
      %p42 = por %p40, %p41
      %p43 = scmp.ne.s32.totalorder %s35, %s38
      %p44 = scmp.eq.s32.totalorder %s13, 0
      %p45 = por %p43, %p44
      %p46 = scmp.ne.s32.totalorder %s35, %s38
      %p47 = scmp.eq.s32.totalorder %s18, 1
      %p48 = por %p46, %p47
      %p49 = scmp.ne.s32.totalorder %s38, %s39
      %p50 = scmp.eq.s32.totalorder %s18, 0
      %p51 = por %p49, %p50
      %p52 = scmp.ne.s32.totalorder %s38, %s39
      %p53 = scmp.eq.s32.totalorder %s19, 1
      %p54 = por %p52, %p53
      %p56 = scmp.ne.s32.totalorder %s39, %s55
      %p57 = scmp.eq.s32.totalorder %s19, 0
      %p58 = por %p56, %p57
      %s59 = ssub.s32 %s21, %s28
      %p60 = scmp.eq.s32.totalorder %s59, 0
      %s62 = sadd.s32 %s61, 1
      %s63 = scalar_select %p60, %s61, %s62
      %p66 = pneg %p60
      %p67 = scmp.eq.s32.totalorder %s13, 1
      %p68 = por %p66, %p67
      %p69 = scmp.ne.s32.totalorder %s61, %s64
      %p70 = scmp.eq.s32.totalorder %s13, 0
      %p71 = por %p69, %p70
      %p72 = scmp.ne.s32.totalorder %s61, %s64
      %p73 = scmp.eq.s32.totalorder %s18, 1
      %p74 = por %p72, %p73
      %p75 = scmp.ne.s32.totalorder %s64, %s65
      %p76 = scmp.eq.s32.totalorder %s18, 0
      %p77 = por %p75, %p76
      %p78 = scmp.ne.s32.totalorder %s64, %s65
      %p79 = scmp.eq.s32.totalorder %s19, 1
      %p80 = por %p78, %p79
      %p82 = scmp.ne.s32.totalorder %s65, %s81
      %p83 = scmp.eq.s32.totalorder %s19, 0
      %p84 = por %p82, %p83
      %s85 = ssub.s32 %s20, %s32
      %p86 = scmp.eq.s32.totalorder %s85, 0
      %s88 = sadd.s32 %s87, 1
      %s89 = scalar_select %p86, %s87, %s88
      %p92 = pneg %p86
      %p93 = scmp.eq.s32.totalorder %s13, 1
      %p94 = por %p92, %p93
      %p95 = scmp.ne.s32.totalorder %s87, %s90
      %p96 = scmp.eq.s32.totalorder %s13, 0
      %p97 = por %p95, %p96
      %p98 = scmp.ne.s32.totalorder %s87, %s90
      %p99 = scmp.eq.s32.totalorder %s18, 1
      %p100 = por %p98, %p99
      %p101 = scmp.ne.s32.totalorder %s90, %s91
      %p102 = scmp.eq.s32.totalorder %s18, 0
      %p103 = por %p101, %p102
      %p104 = scmp.ne.s32.totalorder %s90, %s91
      %p105 = scmp.eq.s32.totalorder %s19, 1
      %p106 = por %p104, %p105
      %p108 = scmp.ne.s32.totalorder %s91, %s107
      %p109 = scmp.eq.s32.totalorder %s19, 0
      %p110 = por %p108, %p109
      %s111 = ssub.s32 %s21, %s28
      %p112 = scmp.eq.s32.totalorder %s111, 0
      %s114 = sadd.s32 %s113, 1
      %s115 = scalar_select %p112, %s113, %s114
      %p118 = pneg %p112
      %p119 = scmp.eq.s32.totalorder %s13, 1
      %p120 = por %p118, %p119
      %p121 = scmp.ne.s32.totalorder %s113, %s116
      %p122 = scmp.eq.s32.totalorder %s13, 0
      %p123 = por %p121, %p122
      %p124 = scmp.ne.s32.totalorder %s113, %s116
      %p125 = scmp.eq.s32.totalorder %s18, 1
      %p126 = por %p124, %p125
      %p127 = scmp.ne.s32.totalorder %s116, %s117
      %p128 = scmp.eq.s32.totalorder %s18, 0
      %p129 = por %p127, %p128
      %p130 = scmp.ne.s32.totalorder %s116, %s117
      %p131 = scmp.eq.s32.totalorder %s19, 1
      %p132 = por %p130, %p131
      %p134 = scmp.ne.s32.totalorder %s117, %s133
      %p135 = scmp.eq.s32.totalorder %s19, 0
      %p136 = por %p134, %p135
      %s137 = ssub.s32 %s20, %s32
      %s138 = ssub.s32 %s21, %s28
      %s139 = sor.u32 %s137, %s138
      %p140 = scmp.eq.s32.totalorder %s139, 0
      %s142 = sadd.s32 %s141, 1
      %s143 = scalar_select %p140, %s141, %s142
      %p146 = pneg %p140
      %p147 = scmp.eq.s32.totalorder %s13, 1
      %p148 = por %p146, %p147
      %p149 = scmp.ne.s32.totalorder %s141, %s144
      %p150 = scmp.eq.s32.totalorder %s13, 0
      %p151 = por %p149, %p150
      %p152 = scmp.ne.s32.totalorder %s141, %s144
      %p153 = scmp.eq.s32.totalorder %s18, 1
      %p154 = por %p152, %p153
      %p155 = scmp.ne.s32.totalorder %s144, %s145
      %p156 = scmp.eq.s32.totalorder %s18, 0
      %p157 = por %p155, %p156
      %p158 = scmp.ne.s32.totalorder %s144, %s145
      %p159 = scmp.eq.s32.totalorder %s19, 1
      %p160 = por %p158, %p159
      %p162 = scmp.ne.s32.totalorder %s145, %s161
      %p163 = scmp.eq.s32.totalorder %s19, 0
      %p164 = por %p162, %p163
      %p165 = scmp.le.s32.totalorder 1, %s13
      %p166 = scmp.lt.s32.totalorder %s13, 3
      %p167 = pnand %p165, %p166
      %p168 = pneg %p167
      // Predicated region
      $region9: #{tpu_custom_call.1} parent=5 // pred_check
        _
      $region10: #{tpu_custom_call.1} parent=5 // pred_check_branch
        %170 = sbr.rel (%p167) target = $region12
      $region11: #{tpu_custom_call.1} parent=5 // pred_region
        %s171 = ssub.s32 %s13, 1
        // Predicated region
        $region13: #{tpu_custom_call.1} parent=11 // pred_check
          %p172 = pneg %p77
        $region14: #{tpu_custom_call.1} parent=11 // pred_check_branch
          %174 = sbr.rel (%p172) target = $region16
        $region15: #{tpu_custom_call.1} parent=11 // pred_region
          %s175 = smul.u32 16, %s23
          %p176 = scmp.lt.s32.totalorder %s175, 15
          %s177 = scalar_select %p176, %s175, 15
          %s178 = smul.addr %s177, 8
          %s179 = scalar_lea.vmem %s1, %s178
          %s180 = smul.u32 16, %s23
        $region16: #{tpu_custom_call.1} parent=11 // pred_fallthru
          _
        // Predicated region
        $region17: #{tpu_custom_call.1} parent=11 // pred_check
          %p181 = pneg %p129
        $region18: #{tpu_custom_call.1} parent=11 // pred_check_branch
          %183 = sbr.rel (%p181) target = $region20
        $region19: #{tpu_custom_call.1} parent=11 // pred_region
          %p184 = scmp.lt.s32.totalorder %s23, 0
          %s185 = scalar_select %p184, %s23, 0
          %s186 = scalar_lea.vmem %s3, %s185
        $region20: #{tpu_custom_call.1} parent=11 // pred_fallthru
          _
      $region12: #{tpu_custom_call.1} parent=5 // pred_fallthru
        _
      %p187 = scmp.lt.s32.totalorder %s13, 2
      // Predicated region
      $region21: #{tpu_custom_call.1} parent=5 // pred_check
        %p188 = pneg %p187
      $region22: #{tpu_custom_call.1} parent=5 // pred_check_branch
        %190 = sbr.rel (%p188) target = $region24
      $region23: #{tpu_custom_call.1} parent=5 // pred_region
        // Predicated region
        $region25: #{tpu_custom_call.1} parent=23 // pred_check
          %p191 = pneg %p45
        $region26: #{tpu_custom_call.1} parent=23 // pred_check_branch
          %193 = sbr.rel (%p191) target = $region28
        $region27: #{tpu_custom_call.1} parent=23 // pred_region
          %s194 = smul.u32 16, %s20
          %p195 = scmp.lt.s32.totalorder %s194, 31
          %s196 = scalar_select %p195, %s194, 31
          %s197 = smul.addr %s196, 8
          %s198 = scalar_lea.vmem %s0, %s197
          %s199 = smul.u32 16, %s20
        $region28: #{tpu_custom_call.1} parent=23 // pred_fallthru
          _
        // Predicated region
        $region29: #{tpu_custom_call.1} parent=23 // pred_check
          %p200 = pneg %p97
        $region30: #{tpu_custom_call.1} parent=23 // pred_check_branch
          %202 = sbr.rel (%p200) target = $region32
        $region31: #{tpu_custom_call.1} parent=23 // pred_region
          %s203 = smul.u32 16, %s20
          %p204 = scmp.lt.s32.totalorder %s203, 31
          %s205 = scalar_select %p204, %s203, 31
          %s206 = smul.addr %s205, 8
          %s207 = scalar_lea.vmem %s2, %s206
          %s208 = smul.u32 16, %s20
        $region32: #{tpu_custom_call.1} parent=23 // pred_fallthru
          _
      $region24: #{tpu_custom_call.1} parent=5 // pred_fallthru
        _
      %p209 = scmp.le.s32.totalorder 1, %s13
      %p210 = scmp.lt.s32.totalorder %s13, 3
      %p211 = pnand %p209, %p210
      %p212 = pneg %p211
      // Predicated region
      $region33: #{tpu_custom_call.1} parent=5 // pred_check
        _
      $region34: #{tpu_custom_call.1} parent=5 // pred_check_branch
        %214 = sbr.rel (%p211) target = $region36
      $region35: #{tpu_custom_call.1} parent=5 // pred_region
        %s215 = ssub.s32 %s13, 1
        %s216 = smul.u32 16, %s22
        %p217 = scmp.lt.s32.totalorder %s216, 31
        %s218 = scalar_select %p217, %s216, 31
        %s219 = smul.addr %s218, 8
        %s220 = scalar_lea.vmem %s0, %s219
        %p221 = pneg %p51
        %p222 = pneg %p48
        %s223 = smul.u32 16, %s23
        %p224 = scmp.lt.s32.totalorder %s223, 15
        %s225 = scalar_select %p224, %s223, 15
        %s226 = smul.addr %s225, 8
        %s227 = scalar_lea.vmem %s1, %s226
        %p228 = pneg %p77
        %p229 = pneg %p74
        %s230 = smul.u32 16, %s22
        %p231 = scmp.lt.s32.totalorder %s230, 31
        %s232 = scalar_select %p231, %s230, 31
        %s233 = smul.addr %s232, 8
        %s234 = scalar_lea.vmem %s2, %s233
        %p235 = pneg %p103
        %p236 = pneg %p100
        %p237 = scmp.lt.s32.totalorder %s23, 0
        %s238 = scalar_select %p237, %s23, 0
        %s239 = scalar_lea.vmem %s3, %s238
        %p240 = pneg %p129
        %p241 = pneg %p126
        %p242 = pneg %p157
        %p243 = pneg %p154
        %s244 = sand.u32 %s144, 1
        %s245 = scalar_lea.sflag [#allocation3], %s244
        %s246 = sand.u32 %s144, 1
        %s247 = smul.addr %s246, 128
        %s248 = scalar_lea.vmem [#allocation2], %s247
        %s249 = smul.u32 16, %s22
        %p250 = scmp.lt.s32.totalorder %s249, 31
        %s251 = scalar_select %p250, %s249, 31
        %s252 = smul.addr %s251, 8
        %s253 = scalar_lea.vmem %s0, %s252
        %s254 = smul.u32 16, %s22
        %s255 = smul.u32 16, %s23
        %p256 = scmp.lt.s32.totalorder %s255, 15
        %s257 = scalar_select %p256, %s255, 15
        %s258 = smul.addr %s257, 8
        %s259 = scalar_lea.vmem %s1, %s258
        %s260 = smul.u32 16, %s23
        %s261 = smul.u32 16, %s22
        %p262 = scmp.lt.s32.totalorder %s261, 31
        %s263 = scalar_select %p262, %s261, 31
        %s264 = smul.addr %s263, 8
        %s265 = scalar_lea.vmem %s2, %s264
        %s266 = smul.u32 16, %s22
        %p267 = scmp.lt.s32.totalorder %s23, 0
        %s268 = scalar_select %p267, %s23, 0
        %s269 = scalar_lea.vmem %s3, %s268
        %s270 = smul.u32 16, %s22
        %v271 = vld [vmem:[%s253] sm:$0xff]
        %v272 = vld [vmem:[%s253 + $0x8] sm:$0xff]
        %v273 = vld [vmem:[%s253 + $0x10] sm:$0xff]
        %v274 = vld [vmem:[%s253 + $0x18] sm:$0xff]
        %v275 = vld [vmem:[%s253 + $0x20] sm:$0xff]
        %v276 = vld [vmem:[%s253 + $0x28] sm:$0xff]
        %v277 = vld [vmem:[%s253 + $0x30] sm:$0xff]
        %v278 = vld [vmem:[%s253 + $0x38] sm:$0xff]
        %v279 = vld [vmem:[%s253 + $0x40] sm:$0xff]
        %v280 = vld [vmem:[%s253 + $0x48] sm:$0xff]
        %v281 = vld [vmem:[%s253 + $0x50] sm:$0xff]
        %v282 = vld [vmem:[%s253 + $0x58] sm:$0xff]
        %v283 = vld [vmem:[%s253 + $0x60] sm:$0xff]
        %v284 = vld [vmem:[%s253 + $0x68] sm:$0xff]
        %v285 = vld [vmem:[%s253 + $0x70] sm:$0xff]
        %v286 = vld [vmem:[%s253 + $0x78] sm:$0xff]
        %v287 = vmul.f32 %v271, -1.0
        %v288 = vmul.f32 %v272, -1.0
        %v289 = vmul.f32 %v273, -1.0
        %v290 = vmul.f32 %v274, -1.0
        %v291 = vmul.f32 %v275, -1.0
        %v292 = vmul.f32 %v276, -1.0
        %v293 = vmul.f32 %v277, -1.0
        %v294 = vmul.f32 %v278, -1.0
        %v295 = vmul.f32 %v279, -1.0
        %v296 = vmul.f32 %v280, -1.0
        %v297 = vmul.f32 %v281, -1.0
        %v298 = vmul.f32 %v282, -1.0
        %v299 = vmul.f32 %v283, -1.0
        %v300 = vmul.f32 %v284, -1.0
        %v301 = vmul.f32 %v285, -1.0
        %v302 = vmul.f32 %v286, -1.0
        %v303 = vld [vmem:[%s259] sm:$0xff]
        %v304 = vld [vmem:[%s259 + $0x8] sm:$0xff]
        %v305 = vld [vmem:[%s259 + $0x10] sm:$0xff]
        %v306 = vld [vmem:[%s259 + $0x18] sm:$0xff]
        %v307 = vld [vmem:[%s259 + $0x20] sm:$0xff]
        %v308 = vld [vmem:[%s259 + $0x28] sm:$0xff]
        %v309 = vld [vmem:[%s259 + $0x30] sm:$0xff]
        %v310 = vld [vmem:[%s259 + $0x38] sm:$0xff]
        %v311 = vld [vmem:[%s259 + $0x40] sm:$0xff]
        %v312 = vld [vmem:[%s259 + $0x48] sm:$0xff]
        %v313 = vld [vmem:[%s259 + $0x50] sm:$0xff]
        %v314 = vld [vmem:[%s259 + $0x58] sm:$0xff]
        %v315 = vld [vmem:[%s259 + $0x60] sm:$0xff]
        %v316 = vld [vmem:[%s259 + $0x68] sm:$0xff]
        %v317 = vld [vmem:[%s259 + $0x70] sm:$0xff]
        %v318 = vld [vmem:[%s259 + $0x78] sm:$0xff]
        %vm319 = vcmask 261120
        %v321 = vsel %vm319, %v287, 0
        %v324 = vsel %vm319, %v288, 0
        %v327 = vsel %vm319, %v289, 0
        %v330 = vsel %vm319, %v290, 0
        %v333 = vsel %vm319, %v291, 0
        %v336 = vsel %vm319, %v292, 0
        %v339 = vsel %vm319, %v293, 0
        %v342 = vsel %vm319, %v294, 0
        %v345 = vsel %vm319, %v295, 0
        %v348 = vsel %vm319, %v296, 0
        %v351 = vsel %vm319, %v297, 0
        %v354 = vsel %vm319, %v298, 0
        %v357 = vsel %vm319, %v299, 0
        %v360 = vsel %vm319, %v300, 0
        %v363 = vsel %vm319, %v301, 0
        %v366 = vsel %vm319, %v302, 0
        %v369 = vsel %vm319, %v303, 0
        %v372 = vsel %vm319, %v304, 0
        %v375 = vsel %vm319, %v305, 0
        %v378 = vsel %vm319, %v306, 0
        %v381 = vsel %vm319, %v307, 0
        %v384 = vsel %vm319, %v308, 0
        %v387 = vsel %vm319, %v309, 0
        %v390 = vsel %vm319, %v310, 0
        %v393 = vsel %vm319, %v311, 0
        %v396 = vsel %vm319, %v312, 0
        %v399 = vsel %vm319, %v313, 0
        %v402 = vsel %vm319, %v314, 0
        %v405 = vsel %vm319, %v315, 0
        %v408 = vsel %vm319, %v316, 0
        %v411 = vsel %vm319, %v317, 0
        %v414 = vsel %vm319, %v318, 0
        %416 = vmatprep.subr.mxu0 0.0
        %417 = vmatpush1.xpose.msra.mxu0 %v369
        %418 = vmatprep.subr.mxu0 0.0
        %419 = vmatpush1.xpose.msra.mxu0 %v372
        %420 = vmatprep.subr.mxu0 0.0
        %421 = vmatpush1.xpose.msra.mxu0 %v375
        %422 = vmatprep.subr.mxu0 0.0
        %423 = vmatpush1.xpose.msra.mxu0 %v378
        %424 = vmatprep.subr.mxu0 0.0
        %425 = vmatpush1.xpose.msra.mxu0 %v381
        %426 = vmatprep.subr.mxu0 0.0
        %427 = vmatpush1.xpose.msra.mxu0 %v384
        %428 = vmatprep.subr.mxu0 0.0
        %429 = vmatpush1.xpose.msra.mxu0 %v387
        %430 = vmatprep.subr.mxu0 0.0
        %431 = vmatpush1.xpose.msra.mxu0 %v390
        %432 = vmatprep.subr.mxu0 0.0
        %433 = vmatpush1.xpose.msra.mxu0 %v393
        %434 = vmatprep.subr.mxu0 0.0
        %435 = vmatpush1.xpose.msra.mxu0 %v396
        %436 = vmatprep.subr.mxu0 0.0
        %437 = vmatpush1.xpose.msra.mxu0 %v399
        %438 = vmatprep.subr.mxu0 0.0
        %439 = vmatpush1.xpose.msra.mxu0 %v402
        %440 = vmatprep.subr.mxu0 0.0
        %441 = vmatpush1.xpose.msra.mxu0 %v405
        %442 = vmatprep.subr.mxu0 0.0
        %443 = vmatpush1.xpose.msra.mxu0 %v408
        %444 = vmatprep.subr.mxu0 0.0
        %445 = vmatpush1.xpose.msra.mxu0 %v411
        %446 = vmatprep.subr.mxu0 0.0
        %447 = vmatpush1.xpose.msra.mxu0 %v414
        %448 = vmatprep.subr.mxu0 0.0
        %449 = vmatpush1.xpose.msra.mxu0 0.0
        %450 = vmatprep.subr.mxu0 0.0
        %451 = vmatpush1.xpose.msra.mxu0 0.0
        %452 = vmatprep.subr.mxu0 0.0
        %453 = vmatpush1.xpose.msra.mxu0 0.0
        %454 = vmatprep.subr.mxu0 0.0
        %455 = vmatpush1.xpose.msra.mxu0 0.0
        %456 = vmatprep.subr.mxu0 0.0
        %457 = vmatpush1.xpose.msra.mxu0 0.0
        %458 = vmatprep.subr.mxu0 0.0
        %459 = vmatpush1.xpose.msra.mxu0 0.0
        %460 = vmatprep.subr.mxu0 0.0
        %461 = vmatpush1.xpose.msra.mxu0 0.0
        %462 = vmatprep.subr.mxu0 0.0
        %463 = vmatpush1.xpose.msra.mxu0 0.0
        %464 = vmatprep.subr.mxu0 0.0
        %465 = vmatpush1.xpose.msra.mxu0 0.0
        %466 = vmatprep.subr.mxu0 0.0
        %467 = vmatpush1.xpose.msra.mxu0 0.0
        %468 = vmatprep.subr.mxu0 0.0
        %469 = vmatpush1.xpose.msra.mxu0 0.0
        %470 = vmatprep.subr.mxu0 0.0
        %471 = vmatpush1.xpose.msra.mxu0 0.0
        %472 = vmatprep.subr.mxu0 0.0
        %473 = vmatpush1.xpose.msra.mxu0 0.0
        %474 = vmatprep.subr.mxu0 0.0
        %475 = vmatpush1.xpose.msra.mxu0 0.0
        %476 = vmatprep.subr.mxu0 0.0
        %477 = vmatpush1.xpose.msra.mxu0 0.0
        %478 = vmatprep.subr.mxu0 0.0
        %479 = vmatpush1.xpose.msra.mxu0 0.0
        %480 = vmatprep.mubr.f32.mxu0 0.0
        %481 = vmatmul.mubr.f32.gmra.mrb[0].mxu0 %v321
        %v482 = vpop.f32.mrb[0].mxu0
        %v483 = vadd.f32 0.0, %v482
        %v484 = vpop.f32.mrb[0].mxu0
        %485 = vmatprep.mubr.f32.mxu0 0.0
        %486 = vmatmul.mubr.f32.gmra.mrb[0].mxu0 %v324
        %v487 = vpop.f32.mrb[0].mxu0
        %v488 = vadd.f32 0.0, %v487
        %v489 = vpop.f32.mrb[0].mxu0
        %490 = vmatprep.mubr.f32.mxu0 0.0
        %491 = vmatmul.mubr.f32.gmra.mrb[0].mxu0 %v327
        %v492 = vpop.f32.mrb[0].mxu0
        %v493 = vadd.f32 0.0, %v492
        %v494 = vpop.f32.mrb[0].mxu0
        %495 = vmatprep.mubr.f32.mxu0 0.0
        %496 = vmatmul.mubr.f32.gmra.mrb[0].mxu0 %v330
        %v497 = vpop.f32.mrb[0].mxu0
        %v498 = vadd.f32 0.0, %v497
        %v499 = vpop.f32.mrb[0].mxu0
        %500 = vmatprep.mubr.f32.mxu0 0.0
        %501 = vmatmul.mubr.f32.gmra.mrb[0].mxu0 %v333
        %v502 = vpop.f32.mrb[0].mxu0
        %v503 = vadd.f32 0.0, %v502
        %v504 = vpop.f32.mrb[0].mxu0
        %505 = vmatprep.mubr.f32.mxu0 0.0
        %506 = vmatmul.mubr.f32.gmra.mrb[0].mxu0 %v336
        %v507 = vpop.f32.mrb[0].mxu0
        %v508 = vadd.f32 0.0, %v507
        %v509 = vpop.f32.mrb[0].mxu0
        %510 = vmatprep.mubr.f32.mxu0 0.0
        %511 = vmatmul.mubr.f32.gmra.mrb[0].mxu0 %v339
        %v512 = vpop.f32.mrb[0].mxu0
        %v513 = vadd.f32 0.0, %v512
        %v514 = vpop.f32.mrb[0].mxu0
        %515 = vmatprep.mubr.f32.mxu0 0.0
        %516 = vmatmul.mubr.f32.gmra.mrb[0].mxu0 %v342
        %v517 = vpop.f32.mrb[0].mxu0
        %v518 = vadd.f32 0.0, %v517
        %v519 = vpop.f32.mrb[0].mxu0
        %520 = vmatprep.mubr.f32.mxu0 0.0
        %521 = vmatmul.mubr.f32.gmra.mrb[0].mxu0 %v345
        %v522 = vpop.f32.mrb[0].mxu0
        %v523 = vadd.f32 0.0, %v522
        %v524 = vpop.f32.mrb[0].mxu0
        %525 = vmatprep.mubr.f32.mxu0 0.0
        %526 = vmatmul.mubr.f32.gmra.mrb[0].mxu0 %v348
        %v527 = vpop.f32.mrb[0].mxu0
        %v528 = vadd.f32 0.0, %v527
        %v529 = vpop.f32.mrb[0].mxu0
        %530 = vmatprep.mubr.f32.mxu0 0.0
        %531 = vmatmul.mubr.f32.gmra.mrb[0].mxu0 %v351
        %v532 = vpop.f32.mrb[0].mxu0
        %v533 = vadd.f32 0.0, %v532
        %v534 = vpop.f32.mrb[0].mxu0
        %535 = vmatprep.mubr.f32.mxu0 0.0
        %536 = vmatmul.mubr.f32.gmra.mrb[0].mxu0 %v354
        %v537 = vpop.f32.mrb[0].mxu0
        %v538 = vadd.f32 0.0, %v537
        %v539 = vpop.f32.mrb[0].mxu0
        %540 = vmatprep.mubr.f32.mxu0 0.0
        %541 = vmatmul.mubr.f32.gmra.mrb[0].mxu0 %v357
        %v542 = vpop.f32.mrb[0].mxu0
        %v543 = vadd.f32 0.0, %v542
        %v544 = vpop.f32.mrb[0].mxu0
        %545 = vmatprep.mubr.f32.mxu0 0.0
        %546 = vmatmul.mubr.f32.gmra.mrb[0].mxu0 %v360
        %v547 = vpop.f32.mrb[0].mxu0
        %v548 = vadd.f32 0.0, %v547
        %v549 = vpop.f32.mrb[0].mxu0
        %550 = vmatprep.mubr.f32.mxu0 0.0
        %551 = vmatmul.mubr.f32.gmra.mrb[0].mxu0 %v363
        %v552 = vpop.f32.mrb[0].mxu0
        %v553 = vadd.f32 0.0, %v552
        %v554 = vpop.f32.mrb[0].mxu0
        %555 = vmatprep.mubr.f32.mxu0 0.0
        %556 = vmatmul.mubr.f32.gmra.mrb[0].mxu0 %v366
        %v557 = vpop.f32.mrb[0].mxu0
        %v558 = vadd.f32 0.0, %v557
        %v559 = vpop.f32.mrb[0].mxu0
        %560 = vdwg.mxu0
        %v561 = vld [vmem:[%s265] sm:$0xff]
        %v562 = vld [vmem:[%s265 + $0x8] sm:$0xff]
        %v563 = vld [vmem:[%s265 + $0x10] sm:$0xff]
        %v564 = vld [vmem:[%s265 + $0x18] sm:$0xff]
        %v565 = vld [vmem:[%s265 + $0x20] sm:$0xff]
        %v566 = vld [vmem:[%s265 + $0x28] sm:$0xff]
        %v567 = vld [vmem:[%s265 + $0x30] sm:$0xff]
        %v568 = vld [vmem:[%s265 + $0x38] sm:$0xff]
        %v569 = vld [vmem:[%s265 + $0x40] sm:$0xff]
        %v570 = vld [vmem:[%s265 + $0x48] sm:$0xff]
        %v571 = vld [vmem:[%s265 + $0x50] sm:$0xff]
        %v572 = vld [vmem:[%s265 + $0x58] sm:$0xff]
        %v573 = vld [vmem:[%s265 + $0x60] sm:$0xff]
        %v574 = vld [vmem:[%s265 + $0x68] sm:$0xff]
        %v575 = vld [vmem:[%s265 + $0x70] sm:$0xff]
        %v576 = vld [vmem:[%s265 + $0x78] sm:$0xff]
        %v577 = vld [vmem:[%s269] sm:$0x1]
        %579 = vset.pattern.permute.xlu0 0
        %580 = vperm.xlu0 %579, %v561
        %v581 = vpop.permute.xlu0 %580
        %584 = vset.pattern.permute.xlu0 0
        %585 = vperm.xlu0 %584, %v562
        %v586 = vpop.permute.xlu0 %585
        %589 = vset.pattern.permute.xlu0 0
        %590 = vperm.xlu0 %589, %v563
        %v591 = vpop.permute.xlu0 %590
        %594 = vset.pattern.permute.xlu0 0
        %595 = vperm.xlu0 %594, %v564
        %v596 = vpop.permute.xlu0 %595
        %599 = vset.pattern.permute.xlu0 0
        %600 = vperm.xlu0 %599, %v565
        %v601 = vpop.permute.xlu0 %600
        %604 = vset.pattern.permute.xlu0 0
        %605 = vperm.xlu0 %604, %v566
        %v606 = vpop.permute.xlu0 %605
        %609 = vset.pattern.permute.xlu0 0
        %610 = vperm.xlu0 %609, %v567
        %v611 = vpop.permute.xlu0 %610
        %614 = vset.pattern.permute.xlu0 0
        %615 = vperm.xlu0 %614, %v568
        %v616 = vpop.permute.xlu0 %615
        %619 = vset.pattern.permute.xlu0 0
        %620 = vperm.xlu0 %619, %v569
        %v621 = vpop.permute.xlu0 %620
        %624 = vset.pattern.permute.xlu0 0
        %625 = vperm.xlu0 %624, %v570
        %v626 = vpop.permute.xlu0 %625
        %629 = vset.pattern.permute.xlu0 0
        %630 = vperm.xlu0 %629, %v571
        %v631 = vpop.permute.xlu0 %630
        %634 = vset.pattern.permute.xlu0 0
        %635 = vperm.xlu0 %634, %v572
        %v636 = vpop.permute.xlu0 %635
        %639 = vset.pattern.permute.xlu0 0
        %640 = vperm.xlu0 %639, %v573
        %v641 = vpop.permute.xlu0 %640
        %644 = vset.pattern.permute.xlu0 0
        %645 = vperm.xlu0 %644, %v574
        %v646 = vpop.permute.xlu0 %645
        %649 = vset.pattern.permute.xlu0 0
        %650 = vperm.xlu0 %649, %v575
        %v651 = vpop.permute.xlu0 %650
        %654 = vset.pattern.permute.xlu0 0
        %655 = vperm.xlu0 %654, %v576
        %v656 = vpop.permute.xlu0 %655
        %v659 = vlaneseq
        %v660 = vshrl.u32 %v659, 7
        %v661 = vsub.s32 0, %v660
        %v662 = vrot.slane %v577, %v661
        %v664 = vadd.f32 %v581, %v662
        %v665 = vadd.f32 %v586, %v662
        %v666 = vadd.f32 %v591, %v662
        %v667 = vadd.f32 %v596, %v662
        %v668 = vadd.f32 %v601, %v662
        %v669 = vadd.f32 %v606, %v662
        %v670 = vadd.f32 %v611, %v662
        %v671 = vadd.f32 %v616, %v662
        %v672 = vadd.f32 %v621, %v662
        %v673 = vadd.f32 %v626, %v662
        %v674 = vadd.f32 %v631, %v662
        %v675 = vadd.f32 %v636, %v662
        %v676 = vadd.f32 %v641, %v662
        %v677 = vadd.f32 %v646, %v662
        %v678 = vadd.f32 %v651, %v662
        %v679 = vadd.f32 %v656, %v662
        %v680 = vadd.f32 %v664, %v483
        %v681 = vadd.f32 %v665, %v488
        %v682 = vadd.f32 %v666, %v493
        %v683 = vadd.f32 %v667, %v498
        %v684 = vadd.f32 %v668, %v503
        %v685 = vadd.f32 %v669, %v508
        %v686 = vadd.f32 %v670, %v513
        %v687 = vadd.f32 %v671, %v518
        %v688 = vadd.f32 %v672, %v523
        %v689 = vadd.f32 %v673, %v528
        %v690 = vadd.f32 %v674, %v533
        %v691 = vadd.f32 %v675, %v538
        %v692 = vadd.f32 %v676, %v543
        %v693 = vadd.f32 %v677, %v548
        %v694 = vadd.f32 %v678, %v553
        %v695 = vadd.f32 %v679, %v558
        %v696 = vmax.f32 %v680, 1.0
        %v697 = vmax.f32 %v681, 1.0
        %v698 = vmax.f32 %v682, 1.0
        %v699 = vmax.f32 %v683, 1.0
        %v700 = vmax.f32 %v684, 1.0
        %v701 = vmax.f32 %v685, 1.0
        %v702 = vmax.f32 %v686, 1.0
        %v703 = vmax.f32 %v687, 1.0
        %v704 = vmax.f32 %v688, 1.0
        %v705 = vmax.f32 %v689, 1.0
        %v706 = vmax.f32 %v690, 1.0
        %v707 = vmax.f32 %v691, 1.0
        %v708 = vmax.f32 %v692, 1.0
        %v709 = vmax.f32 %v693, 1.0
        %v710 = vmax.f32 %v694, 1.0
        %v711 = vmax.f32 %v695, 1.0
        %v712 = vrcp.pop %v696
        %v713 = vrcp.pop %v697
        %v714 = vrcp.pop %v698
        %v715 = vrcp.pop %v699
        %v716 = vrcp.pop %v700
        %v717 = vrcp.pop %v701
        %v718 = vrcp.pop %v702
        %v719 = vrcp.pop %v703
        %v720 = vrcp.pop %v704
        %v721 = vrcp.pop %v705
        %v722 = vrcp.pop %v706
        %v723 = vrcp.pop %v707
        %v724 = vrcp.pop %v708
        %v725 = vrcp.pop %v709
        %v726 = vrcp.pop %v710
        %v727 = vrcp.pop %v711
        %v728 = vmul.f32 %v696, %v712
        %v729 = vmul.f32 %v697, %v713
        %v730 = vmul.f32 %v698, %v714
        %v731 = vmul.f32 %v699, %v715
        %v732 = vmul.f32 %v700, %v716
        %v733 = vmul.f32 %v701, %v717
        %v734 = vmul.f32 %v702, %v718
        %v735 = vmul.f32 %v703, %v719
        %v736 = vmul.f32 %v704, %v720
        %v737 = vmul.f32 %v705, %v721
        %v738 = vmul.f32 %v706, %v722
        %v739 = vmul.f32 %v707, %v723
        %v740 = vmul.f32 %v708, %v724
        %v741 = vmul.f32 %v709, %v725
        %v742 = vmul.f32 %v710, %v726
        %v743 = vmul.f32 %v711, %v727
        %v744 = vsub.f32 2.0, %v728
        %v745 = vsub.f32 2.0, %v729
        %v746 = vsub.f32 2.0, %v730
        %v747 = vsub.f32 2.0, %v731
        %v748 = vsub.f32 2.0, %v732
        %v749 = vsub.f32 2.0, %v733
        %v750 = vsub.f32 2.0, %v734
        %v751 = vsub.f32 2.0, %v735
        %v752 = vsub.f32 2.0, %v736
        %v753 = vsub.f32 2.0, %v737
        %v754 = vsub.f32 2.0, %v738
        %v755 = vsub.f32 2.0, %v739
        %v756 = vsub.f32 2.0, %v740
        %v757 = vsub.f32 2.0, %v741
        %v758 = vsub.f32 2.0, %v742
        %v759 = vsub.f32 2.0, %v743
        %v760 = vmul.f32 %v712, %v744
        %v761 = vmul.f32 %v713, %v745
        %v762 = vmul.f32 %v714, %v746
        %v763 = vmul.f32 %v715, %v747
        %v764 = vmul.f32 %v716, %v748
        %v765 = vmul.f32 %v717, %v749
        %v766 = vmul.f32 %v718, %v750
        %v767 = vmul.f32 %v719, %v751
        %v768 = vmul.f32 %v720, %v752
        %v769 = vmul.f32 %v721, %v753
        %v770 = vmul.f32 %v722, %v754
        %v771 = vmul.f32 %v723, %v755
        %v772 = vmul.f32 %v724, %v756
        %v773 = vmul.f32 %v725, %v757
        %v774 = vmul.f32 %v726, %v758
        %v775 = vmul.f32 %v727, %v759
        %776 = vst [vmem:[%s248] sm:$0xff] %v760
        %777 = vst [vmem:[%s248 + $0x8] sm:$0xff] %v761
        %778 = vst [vmem:[%s248 + $0x10] sm:$0xff] %v762
        %779 = vst [vmem:[%s248 + $0x18] sm:$0xff] %v763
        %780 = vst [vmem:[%s248 + $0x20] sm:$0xff] %v764
        %781 = vst [vmem:[%s248 + $0x28] sm:$0xff] %v765
        %782 = vst [vmem:[%s248 + $0x30] sm:$0xff] %v766
        %783 = vst [vmem:[%s248 + $0x38] sm:$0xff] %v767
        %784 = vst [vmem:[%s248 + $0x40] sm:$0xff] %v768
        %785 = vst [vmem:[%s248 + $0x48] sm:$0xff] %v769
        %786 = vst [vmem:[%s248 + $0x50] sm:$0xff] %v770
        %787 = vst [vmem:[%s248 + $0x58] sm:$0xff] %v771
        %788 = vst [vmem:[%s248 + $0x60] sm:$0xff] %v772
        %789 = vst [vmem:[%s248 + $0x68] sm:$0xff] %v773
        %790 = vst [vmem:[%s248 + $0x70] sm:$0xff] %v774
        %791 = vst [vmem:[%s248 + $0x78] sm:$0xff] %v775
        %s792 = sand.u32 %s144, 1
        %s793 = scalar_lea.sflag [#allocation3], %s792
        %s794 = sand.u32 %s144, 1
        %s795 = smul.addr %s794, 128
        %s796 = scalar_lea.vmem [#allocation2], %s795
        // Predicated region
        $region37: #{tpu_custom_call.1} parent=35 // pred_check
          %p797 = pneg %p154
        $region38: #{tpu_custom_call.1} parent=35 // pred_check_branch
          %799 = sbr.rel (%p797) target = $region40
        $region39: #{tpu_custom_call.1} parent=35 // pred_region
          %s800 = smul.u32 16, %s22
          %s802 = ssub.s32 2048, 2048
          %803 = vsyncadd %s793, %s802
          %s804 = sadd.s32 %s23, %s800
          %s805 = smul.addr %s804, 128
          %s806 = scalar_lea.hbm %s4, %s805
          %s807 = sshll.u32 %s796, 4
          %s808 = int_to_ptr.vmem [resolvable:$true] %s807
          %813 = dma.vmem_to_hbm [thread:$0]  %s808, 2048, %s806, %s793, 128, 128, 8
        $region40: #{tpu_custom_call.1} parent=35 // pred_fallthru
          _
      $region36: #{tpu_custom_call.1} parent=5 // pred_fallthru
        _
      %p814 = scmp.le.s32.totalorder 2, %s13
      // Predicated region
      $region41: #{tpu_custom_call.1} parent=5 // pred_check
        %p815 = pneg %p814
      $region42: #{tpu_custom_call.1} parent=5 // pred_check_branch
        %817 = sbr.rel (%p815) target = $region44
      $region43: #{tpu_custom_call.1} parent=5 // pred_region
        %s818 = ssub.s32 %s13, 2
        // Predicated region
        $region45: #{tpu_custom_call.1} parent=43 // pred_check
          %p819 = pneg %p160
        $region46: #{tpu_custom_call.1} parent=43 // pred_check_branch
          %821 = sbr.rel (%p819) target = $region48
        $region47: #{tpu_custom_call.1} parent=43 // pred_region
          %s822 = sand.u32 %s145, 1
          %s823 = scalar_lea.sflag [#allocation3], %s822
          %s824 = sand.u32 %s145, 1
          %s825 = smul.addr %s824, 128
          %s826 = scalar_lea.vmem [#allocation2], %s825
          %827 = dma.done %s823, 2048
        $region48: #{tpu_custom_call.1} parent=43 // pred_fallthru
          _
      $region44: #{tpu_custom_call.1} parent=5 // pred_fallthru
        _
    $region6: #{tpu_custom_call.1} parent=1 // loop_footer
      %s17 = sadd.s32 1, %s13
    $region7: #{tpu_custom_call.1} parent=1 // loop_footer_branch
      %12 = sbr.rel target = $region3
    $region8: #{tpu_custom_call.1} parent=1 // loop_exit
      _
    %828 = vsyncpa [#allocation3], 1
    %s829 = scalar_lea.sflag [#allocation3], 1
    %830 = vsyncpa %s829, 1

</llo_original>
